<compile_context>
chip_gen: v7x
topology: tpu7x:2x2x1
jax: 0.10.0
libtpu: 0.0.40
codegen_flags: <defaults>
</compile_context>

<pallas_src>
import functools

import numpy as np
import jax
import jax.numpy as jnp
from jax.experimental import pallas as pl
from jax.experimental.pallas import tpu as pltpu


def _round_up(n, m):
    return ((n + m - 1) // m) * m


# Cap on row ids scalar-prefetched per pallas_call: 1-D int32 SMEM pads to
# next_pow2(4N) bytes, so 32768 rows -> 128 KiB of SMEM.
_MAX_SMEM_IDX_ROWS = 32768


# ---------------------------------------------------------------------------
# Kernels
# ---------------------------------------------------------------------------
def _gather_vmem_kernel(idx_ref, table_ref, out_ref, *, rows_per_tile, pack):
    """Gather rows from a VMEM-resident table into a lane-dense output tile.

    idx_ref   : (chunk_rows,) int32 in SMEM — flattened row ids (scalar prefetch)
    table_ref : (V, D) table, whole array resident in VMEM (fetched once)
    out_ref   : (rows_per_tile // pack, pack * D) lane-dense output tile
    """
    t = pl.program_id(0)
    base = t * rows_per_tile
    n_groups = rows_per_tile // pack
    for g in range(n_groups):
        parts = []
        for p in range(pack):
            row = idx_ref[base + g * pack + p]
            parts.append(table_ref[pl.ds(row, 1), :])        # dynamic (1, D) read
        packed = parts[0] if pack == 1 else jnp.concatenate(parts, axis=-1)
        out_ref[pl.ds(g, 1), :] = packed                      # 128-lane store


def _gather_hbm_kernel(idx_ref, table_hbm, out_ref, sem, *, rows_per_tile):
    """Large-vocab fallback: DMA rows straight from the HBM table into out_ref.

    No VMEM->VMEM staging copy; one shared DMA semaphore; all scalar index
    reads are hoisted above the first wait (SMEM sst->sld forwarding breaks
    across .wait()).  Destination rows are full-width slices of the output
    block, so no lane-offset DMA windows are needed.
    """
    t = pl.program_id(0)
    base = t * rows_per_tile

    # Hoist every scalar index read before any DMA wait.
    rows = [idx_ref[base + r] for r in range(rows_per_tile)]

    # Issue all row DMAs (they share one semaphore and overlap) ...
    copies = []
    for r in range(rows_per_tile):
        cp = pltpu.make_async_copy(
            table_hbm.at[pl.ds(rows[r], 1), :],   # (1, D) row in HBM
            out_ref.at[pl.ds(r, 1), :],           # directly into the output tile
            sem.at[0],
        )
        cp.start()
        copies.append(cp)
    # ... then wait for all of them.
    for cp in copies:
        cp.wait()
    # NOTE: further wins here (per review) would be deduplicating repeated ids
    # and coalescing runs of contiguous ids into multi-row DMAs.


# ---------------------------------------------------------------------------
# Wrapper
# ---------------------------------------------------------------------------
def features_embedding(x, offsets, table, *, rows_per_tile=None,
                       force_hbm_gather=False,
                       vmem_table_budget_bytes=8 << 20):
    """x: (B, F) int; offsets: (F,) int; table: (V, D) float -> (B, F, D)."""
    B, F = x.shape
    V, D = table.shape

    # Fold the per-field offsets add into XLA; one flattened row id per lookup.
    idx = (x.astype(jnp.int32) + offsets.reshape(1, F).astype(jnp.int32))
    idx = idx.reshape(B * F)
    total = B * F

    table_bytes = V * D * table.dtype.itemsize
    # VMEM-resident table whenever it (double-buffered) comfortably fits the
    # scoped VMEM limit; budget kept well under v7x's 64 MiB physical VMEM.
    use_vmem_table = (not force_hbm_gather) and table_bytes <= vmem_table_budget_bytes

    # Lane-dense packing (VMEM path only): 128//D consecutive rows per 128-lane
    # output row.  The HBM path keeps (rows, D) blocks so row DMAs can land
    # directly in out_ref without lane-offset destination windows.
    pack = (128 // D) if (use_vmem_table and D < 128 and 128 % D == 0) else 1
    lane_w = pack * D
    unit = 8 * pack                       # smallest (8,128)-aligned tile, in rows

    padded_min = _round_up(total, unit)
    tile = 512 if rows_per_tile is None else rows_per_tile
    tile = max(unit, (tile // unit) * unit)
    tile = min(tile, padded_min)          # never pad beyond one tile of real work
    if rows_per_tile is None and padded_min >= 2 * unit:
        # Keep >= 2 grid steps so the "parallel" axis feeds both v7x TensorCores.
        tile = min(tile, _round_up(-(-padded_min // 2), unit))
    rows_per_tile = tile

    padded = _round_up(total, rows_per_tile)
    if padded != total:
        # Padded lookups gather row 0 (always valid) and are sliced off below.
        idx = jnp.concatenate([idx, jnp.zeros((padded - total,), jnp.int32)])

    groups_per_tile = rows_per_tile // pack

    if use_vmem_table:
        kernel = functools.partial(_gather_vmem_kernel,
                                   rows_per_tile=rows_per_tile, pack=pack)
        in_specs = [pl.BlockSpec((V, D), lambda t, idx_ref: (0, 0))]  # table -> VMEM once
        scratch_shapes = []
    else:
        kernel = functools.partial(_gather_hbm_kernel,
                                   rows_per_tile=rows_per_tile)
        in_specs = [pl.BlockSpec(memory_space=pl.ANY)]                # table stays in HBM
        scratch_shapes = [pltpu.SemaphoreType.DMA((1,))]              # single shared sem

    compiler_params = pltpu.CompilerParams(
        dimension_semantics=("parallel",),        # independent tiles; megacore-friendly
        vmem_limit_bytes=32 * 1024 * 1024,        # explicit per-generation-safe limit
    )

    def run_chunk(idx_chunk):
        chunk_rows = idx_chunk.shape[0]
        n_tiles = chunk_rows // rows_per_tile
        return pl.pallas_call(
            kernel,
            out_shape=jax.ShapeDtypeStruct((chunk_rows // pack, lane_w), table.dtype),
            grid_spec=pltpu.PrefetchScalarGridSpec(
                num_scalar_prefetch=1,             # idx chunk -> SMEM
                grid=(n_tiles,),
                in_specs=in_specs,
                out_specs=pl.BlockSpec((groups_per_tile, lane_w),
                                       lambda t, idx_ref: (t, 0)),
                scratch_shapes=scratch_shapes,
            ),
            compiler_params=compiler_params,
        )(idx_chunk, table)

    # Bound SMEM usage per call: chunk the flattened rows so each pallas_call
    # scalar-prefetches at most _MAX_SMEM_IDX_ROWS indices.
    rows_per_call = max(rows_per_tile,
                        (_MAX_SMEM_IDX_ROWS // rows_per_tile) * rows_per_tile)
    if padded <= rows_per_call:
        out_flat = run_chunk(idx)
    else:
        out_flat = jnp.concatenate(
            [run_chunk(idx[s:s + rows_per_call]) for s in range(0, padded, rows_per_call)],
            axis=0)

    # (padded // pack, pack*D) and (padded, D) share the same row-major layout,
    # so these reshapes are free.
    return out_flat.reshape(padded, D)[:total].reshape(B, F, D)


def init_params(field_dims, embed_dim, key):
    """Deterministic xavier_uniform-style init, matching the PyTorch module."""
    vocab = int(np.sum(field_dims))
    limit = float(np.sqrt(6.0 / (vocab + embed_dim)))
    table = jax.random.uniform(key, (vocab, embed_dim), dtype=jnp.float32,
                               minval=-limit, maxval=limit)
    offsets = jnp.asarray(
        np.array((0, *np.cumsum(field_dims)[:-1]), dtype=np.int32))
    return table, offsets


if __name__ == "__main__":
    key = jax.random.PRNGKey(0)
    k_table, k_x = jax.random.split(key)

    # Small shapes consistent with the module's forward.
    field_dims = np.array([4, 6, 8, 10], dtype=np.int64)   # num_fields = 4, vocab = 28
    embed_dim = 32
    batch = 8

    table, offsets = init_params(field_dims, embed_dim, k_table)

    # x[:, f] in [0, field_dims[f]) — per-field categorical ids.
    u = jax.random.uniform(k_x, (batch, len(field_dims)), dtype=jnp.float32)
    x = (u * jnp.asarray(field_dims, dtype=jnp.float32)).astype(jnp.int32)

    # Reference in plain JAX (same semantics as the PyTorch module).
    ref = jnp.take(table, x + offsets[None, :], axis=0)

    # Primary path: VMEM-resident table, lane-dense packed output.
    out_vmem = features_embedding(x, offsets, table)
    jax.block_until_ready(out_vmem)
    np.testing.assert_array_equal(np.asarray(out_vmem), np.asarray(ref))
    assert out_vmem.shape == (batch, len(field_dims), embed_dim)

    # Fallback path: HBM table with direct row DMAs into the output tile.
    out_hbm = features_embedding(x, offsets, table, force_hbm_gather=True)
    jax.block_until_ready(out_hbm)
    np.testing.assert_array_equal(np.asarray(out_hbm), np.asarray(ref))

    print("KERNEL_OK")
</pallas_src>

<mosaic_0001>
module attributes {stable_mosaic.version = 11 : i64} {
  func.func @_gather_vmem_kernel(%arg0: i32, %arg1: memref<32xi32, #tpu.memory_space<smem>>, %arg2: memref<28x32xf32, #tpu.memory_space<vmem>>, %arg3: memref<8x128xf32, #tpu.memory_space<vmem>>) attributes {dimension_semantics = [#tpu.dimension_semantics<parallel>], iteration_bounds = array<i64: 1>, scalar_prefetch = 1 : i64, scratch_operands = 0 : i64, tpu.core_type = #tpu.core_type<tc>, window_params = [{pipeline_mode = #tpu.pipeline_mode<synchronous>, transform_indices = @transform_0, window_bounds = array<i64: 28, 32>}, {transform_indices = @transform_1, window_bounds = array<i64: 8, 128>}]} {
    %c32_i32 = arith.constant 32 : i32
    %0 = arith.muli %arg0, %c32_i32 : i32
    %c0_i32 = arith.constant 0 : i32
    %1 = arith.addi %0, %c0_i32 : i32
    %c0_i32_0 = arith.constant 0 : i32
    %2 = arith.addi %1, %c0_i32_0 : i32
    %3 = arith.index_cast %2 : i32 to index
    %4 = memref.load %arg1[%3] : memref<32xi32, #tpu.memory_space<smem>>
    %5 = arith.index_cast %4 : i32 to index
    %c0 = arith.constant 0 : index
    %6 = vector.load %arg2[%5, %c0] : memref<28x32xf32, #tpu.memory_space<vmem>>, vector<1x32xf32>
    %c0_i32_1 = arith.constant 0 : i32
    %7 = arith.addi %0, %c0_i32_1 : i32
    %c1_i32 = arith.constant 1 : i32
    %8 = arith.addi %7, %c1_i32 : i32
    %9 = arith.index_cast %8 : i32 to index
    %10 = memref.load %arg1[%9] : memref<32xi32, #tpu.memory_space<smem>>
    %11 = arith.index_cast %10 : i32 to index
    %c0_2 = arith.constant 0 : index
    %12 = vector.load %arg2[%11, %c0_2] : memref<28x32xf32, #tpu.memory_space<vmem>>, vector<1x32xf32>
    %c0_i32_3 = arith.constant 0 : i32
    %13 = arith.addi %0, %c0_i32_3 : i32
    %c2_i32 = arith.constant 2 : i32
    %14 = arith.addi %13, %c2_i32 : i32
    %15 = arith.index_cast %14 : i32 to index
    %16 = memref.load %arg1[%15] : memref<32xi32, #tpu.memory_space<smem>>
    %17 = arith.index_cast %16 : i32 to index
    %c0_4 = arith.constant 0 : index
    %18 = vector.load %arg2[%17, %c0_4] : memref<28x32xf32, #tpu.memory_space<vmem>>, vector<1x32xf32>
    %c0_i32_5 = arith.constant 0 : i32
    %19 = arith.addi %0, %c0_i32_5 : i32
    %c3_i32 = arith.constant 3 : i32
    %20 = arith.addi %19, %c3_i32 : i32
    %21 = arith.index_cast %20 : i32 to index
    %22 = memref.load %arg1[%21] : memref<32xi32, #tpu.memory_space<smem>>
    %23 = arith.index_cast %22 : i32 to index
    %c0_6 = arith.constant 0 : index
    %24 = vector.load %arg2[%23, %c0_6] : memref<28x32xf32, #tpu.memory_space<vmem>>, vector<1x32xf32>
    %25 = tpu.concatenate %6, %12, %18, %24 in 1 : vector<1x32xf32>, vector<1x32xf32>, vector<1x32xf32>, vector<1x32xf32> -> vector<1x128xf32>
    %c0_7 = arith.constant 0 : index
    %c0_8 = arith.constant 0 : index
    %26 = vector.load %arg3[%c0_7, %c0_8] : memref<8x128xf32, #tpu.memory_space<vmem>>, vector<1x128xf32>
    tpu.vector_store %arg3[%c0_7, %c0_8], %25 {strides = array<i32>} : memref<8x128xf32, #tpu.memory_space<vmem>>, vector<1x128xf32>,
    %c4_i32 = arith.constant 4 : i32
    %27 = arith.addi %0, %c4_i32 : i32
    %c0_i32_9 = arith.constant 0 : i32
    %28 = arith.addi %27, %c0_i32_9 : i32
    %29 = arith.index_cast %28 : i32 to index
    %30 = memref.load %arg1[%29] : memref<32xi32, #tpu.memory_space<smem>>
    %31 = arith.index_cast %30 : i32 to index
    %c0_10 = arith.constant 0 : index
    %32 = vector.load %arg2[%31, %c0_10] : memref<28x32xf32, #tpu.memory_space<vmem>>, vector<1x32xf32>
    %c4_i32_11 = arith.constant 4 : i32
    %33 = arith.addi %0, %c4_i32_11 : i32
    %c1_i32_12 = arith.constant 1 : i32
    %34 = arith.addi %33, %c1_i32_12 : i32
    %35 = arith.index_cast %34 : i32 to index
    %36 = memref.load %arg1[%35] : memref<32xi32, #tpu.memory_space<smem>>
    %37 = arith.index_cast %36 : i32 to index
    %c0_13 = arith.constant 0 : index
    %38 = vector.load %arg2[%37, %c0_13] : memref<28x32xf32, #tpu.memory_space<vmem>>, vector<1x32xf32>
    %c4_i32_14 = arith.constant 4 : i32
    %39 = arith.addi %0, %c4_i32_14 : i32
    %c2_i32_15 = arith.constant 2 : i32
    %40 = arith.addi %39, %c2_i32_15 : i32
    %41 = arith.index_cast %40 : i32 to index
    %42 = memref.load %arg1[%41] : memref<32xi32, #tpu.memory_space<smem>>
    %43 = arith.index_cast %42 : i32 to index
    %c0_16 = arith.constant 0 : index
    %44 = vector.load %arg2[%43, %c0_16] : memref<28x32xf32, #tpu.memory_space<vmem>>, vector<1x32xf32>
    %c4_i32_17 = arith.constant 4 : i32
    %45 = arith.addi %0, %c4_i32_17 : i32
    %c3_i32_18 = arith.constant 3 : i32
    %46 = arith.addi %45, %c3_i32_18 : i32
    %47 = arith.index_cast %46 : i32 to index
    %48 = memref.load %arg1[%47] : memref<32xi32, #tpu.memory_space<smem>>
    %49 = arith.index_cast %48 : i32 to index
    %c0_19 = arith.constant 0 : index
    %50 = vector.load %arg2[%49, %c0_19] : memref<28x32xf32, #tpu.memory_space<vmem>>, vector<1x32xf32>
    %51 = tpu.concatenate %32, %38, %44, %50 in 1 : vector<1x32xf32>, vector<1x32xf32>, vector<1x32xf32>, vector<1x32xf32> -> vector<1x128xf32>
    %c1 = arith.constant 1 : index
    %c0_20 = arith.constant 0 : index
    %52 = vector.load %arg3[%c1, %c0_20] : memref<8x128xf32, #tpu.memory_space<vmem>>, vector<1x128xf32>
    tpu.vector_store %arg3[%c1, %c0_20], %51 {strides = array<i32>} : memref<8x128xf32, #tpu.memory_space<vmem>>, vector<1x128xf32>,
    %c8_i32 = arith.constant 8 : i32
    %53 = arith.addi %0, %c8_i32 : i32
    %c0_i32_21 = arith.constant 0 : i32
    %54 = arith.addi %53, %c0_i32_21 : i32
    %55 = arith.index_cast %54 : i32 to index
    %56 = memref.load %arg1[%55] : memref<32xi32, #tpu.memory_space<smem>>
    %57 = arith.index_cast %56 : i32 to index
    %c0_22 = arith.constant 0 : index
    %58 = vector.load %arg2[%57, %c0_22] : memref<28x32xf32, #tpu.memory_space<vmem>>, vector<1x32xf32>
    %c8_i32_23 = arith.constant 8 : i32
    %59 = arith.addi %0, %c8_i32_23 : i32
    %c1_i32_24 = arith.constant 1 : i32
    %60 = arith.addi %59, %c1_i32_24 : i32
    %61 = arith.index_cast %60 : i32 to index
    %62 = memref.load %arg1[%61] : memref<32xi32, #tpu.memory_space<smem>>
    %63 = arith.index_cast %62 : i32 to index
    %c0_25 = arith.constant 0 : index
    %64 = vector.load %arg2[%63, %c0_25] : memref<28x32xf32, #tpu.memory_space<vmem>>, vector<1x32xf32>
    %c8_i32_26 = arith.constant 8 : i32
    %65 = arith.addi %0, %c8_i32_26 : i32
    %c2_i32_27 = arith.constant 2 : i32
    %66 = arith.addi %65, %c2_i32_27 : i32
    %67 = arith.index_cast %66 : i32 to index
    %68 = memref.load %arg1[%67] : memref<32xi32, #tpu.memory_space<smem>>
    %69 = arith.index_cast %68 : i32 to index
    %c0_28 = arith.constant 0 : index
    %70 = vector.load %arg2[%69, %c0_28] : memref<28x32xf32, #tpu.memory_space<vmem>>, vector<1x32xf32>
    %c8_i32_29 = arith.constant 8 : i32
    %71 = arith.addi %0, %c8_i32_29 : i32
    %c3_i32_30 = arith.constant 3 : i32
    %72 = arith.addi %71, %c3_i32_30 : i32
    %73 = arith.index_cast %72 : i32 to index
    %74 = memref.load %arg1[%73] : memref<32xi32, #tpu.memory_space<smem>>
    %75 = arith.index_cast %74 : i32 to index
    %c0_31 = arith.constant 0 : index
    %76 = vector.load %arg2[%75, %c0_31] : memref<28x32xf32, #tpu.memory_space<vmem>>, vector<1x32xf32>
    %77 = tpu.concatenate %58, %64, %70, %76 in 1 : vector<1x32xf32>, vector<1x32xf32>, vector<1x32xf32>, vector<1x32xf32> -> vector<1x128xf32>
    %c2 = arith.constant 2 : index
    %c0_32 = arith.constant 0 : index
    %78 = vector.load %arg3[%c2, %c0_32] : memref<8x128xf32, #tpu.memory_space<vmem>>, vector<1x128xf32>
    tpu.vector_store %arg3[%c2, %c0_32], %77 {strides = array<i32>} : memref<8x128xf32, #tpu.memory_space<vmem>>, vector<1x128xf32>,
    %c12_i32 = arith.constant 12 : i32
    %79 = arith.addi %0, %c12_i32 : i32
    %c0_i32_33 = arith.constant 0 : i32
    %80 = arith.addi %79, %c0_i32_33 : i32
    %81 = arith.index_cast %80 : i32 to index
    %82 = memref.load %arg1[%81] : memref<32xi32, #tpu.memory_space<smem>>
    %83 = arith.index_cast %82 : i32 to index
    %c0_34 = arith.constant 0 : index
    %84 = vector.load %arg2[%83, %c0_34] : memref<28x32xf32, #tpu.memory_space<vmem>>, vector<1x32xf32>
    %c12_i32_35 = arith.constant 12 : i32
    %85 = arith.addi %0, %c12_i32_35 : i32
    %c1_i32_36 = arith.constant 1 : i32
    %86 = arith.addi %85, %c1_i32_36 : i32
    %87 = arith.index_cast %86 : i32 to index
    %88 = memref.load %arg1[%87] : memref<32xi32, #tpu.memory_space<smem>>
    %89 = arith.index_cast %88 : i32 to index
    %c0_37 = arith.constant 0 : index
    %90 = vector.load %arg2[%89, %c0_37] : memref<28x32xf32, #tpu.memory_space<vmem>>, vector<1x32xf32>
    %c12_i32_38 = arith.constant 12 : i32
    %91 = arith.addi %0, %c12_i32_38 : i32
    %c2_i32_39 = arith.constant 2 : i32
    %92 = arith.addi %91, %c2_i32_39 : i32
    %93 = arith.index_cast %92 : i32 to index
    %94 = memref.load %arg1[%93] : memref<32xi32, #tpu.memory_space<smem>>
    %95 = arith.index_cast %94 : i32 to index
    %c0_40 = arith.constant 0 : index
    %96 = vector.load %arg2[%95, %c0_40] : memref<28x32xf32, #tpu.memory_space<vmem>>, vector<1x32xf32>
    %c12_i32_41 = arith.constant 12 : i32
    %97 = arith.addi %0, %c12_i32_41 : i32
    %c3_i32_42 = arith.constant 3 : i32
    %98 = arith.addi %97, %c3_i32_42 : i32
    %99 = arith.index_cast %98 : i32 to index
    %100 = memref.load %arg1[%99] : memref<32xi32, #tpu.memory_space<smem>>
    %101 = arith.index_cast %100 : i32 to index
    %c0_43 = arith.constant 0 : index
    %102 = vector.load %arg2[%101, %c0_43] : memref<28x32xf32, #tpu.memory_space<vmem>>, vector<1x32xf32>
    %103 = tpu.concatenate %84, %90, %96, %102 in 1 : vector<1x32xf32>, vector<1x32xf32>, vector<1x32xf32>, vector<1x32xf32> -> vector<1x128xf32>
    %c3 = arith.constant 3 : index
    %c0_44 = arith.constant 0 : index
    %104 = vector.load %arg3[%c3, %c0_44] : memref<8x128xf32, #tpu.memory_space<vmem>>, vector<1x128xf32>
    tpu.vector_store %arg3[%c3, %c0_44], %103 {strides = array<i32>} : memref<8x128xf32, #tpu.memory_space<vmem>>, vector<1x128xf32>,
    %c16_i32 = arith.constant 16 : i32
    %105 = arith.addi %0, %c16_i32 : i32
    %c0_i32_45 = arith.constant 0 : i32
    %106 = arith.addi %105, %c0_i32_45 : i32
    %107 = arith.index_cast %106 : i32 to index
    %108 = memref.load %arg1[%107] : memref<32xi32, #tpu.memory_space<smem>>
    %109 = arith.index_cast %108 : i32 to index
    %c0_46 = arith.constant 0 : index
    %110 = vector.load %arg2[%109, %c0_46] : memref<28x32xf32, #tpu.memory_space<vmem>>, vector<1x32xf32>
    %c16_i32_47 = arith.constant 16 : i32
    %111 = arith.addi %0, %c16_i32_47 : i32
    %c1_i32_48 = arith.constant 1 : i32
    %112 = arith.addi %111, %c1_i32_48 : i32
    %113 = arith.index_cast %112 : i32 to index
    %114 = memref.load %arg1[%113] : memref<32xi32, #tpu.memory_space<smem>>
    %115 = arith.index_cast %114 : i32 to index
    %c0_49 = arith.constant 0 : index
    %116 = vector.load %arg2[%115, %c0_49] : memref<28x32xf32, #tpu.memory_space<vmem>>, vector<1x32xf32>
    %c16_i32_50 = arith.constant 16 : i32
    %117 = arith.addi %0, %c16_i32_50 : i32
    %c2_i32_51 = arith.constant 2 : i32
    %118 = arith.addi %117, %c2_i32_51 : i32
    %119 = arith.index_cast %118 : i32 to index
    %120 = memref.load %arg1[%119] : memref<32xi32, #tpu.memory_space<smem>>
    %121 = arith.index_cast %120 : i32 to index
    %c0_52 = arith.constant 0 : index
    %122 = vector.load %arg2[%121, %c0_52] : memref<28x32xf32, #tpu.memory_space<vmem>>, vector<1x32xf32>
    %c16_i32_53 = arith.constant 16 : i32
    %123 = arith.addi %0, %c16_i32_53 : i32
    %c3_i32_54 = arith.constant 3 : i32
    %124 = arith.addi %123, %c3_i32_54 : i32
    %125 = arith.index_cast %124 : i32 to index
    %126 = memref.load %arg1[%125] : memref<32xi32, #tpu.memory_space<smem>>
    %127 = arith.index_cast %126 : i32 to index
    %c0_55 = arith.constant 0 : index
    %128 = vector.load %arg2[%127, %c0_55] : memref<28x32xf32, #tpu.memory_space<vmem>>, vector<1x32xf32>
    %129 = tpu.concatenate %110, %116, %122, %128 in 1 : vector<1x32xf32>, vector<1x32xf32>, vector<1x32xf32>, vector<1x32xf32> -> vector<1x128xf32>
    %c4 = arith.constant 4 : index
    %c0_56 = arith.constant 0 : index
    %130 = vector.load %arg3[%c4, %c0_56] : memref<8x128xf32, #tpu.memory_space<vmem>>, vector<1x128xf32>
    tpu.vector_store %arg3[%c4, %c0_56], %129 {strides = array<i32>} : memref<8x128xf32, #tpu.memory_space<vmem>>, vector<1x128xf32>,
    %c20_i32 = arith.constant 20 : i32
    %131 = arith.addi %0, %c20_i32 : i32
    %c0_i32_57 = arith.constant 0 : i32
    %132 = arith.addi %131, %c0_i32_57 : i32
    %133 = arith.index_cast %132 : i32 to index
    %134 = memref.load %arg1[%133] : memref<32xi32, #tpu.memory_space<smem>>
    %135 = arith.index_cast %134 : i32 to index
    %c0_58 = arith.constant 0 : index
    %136 = vector.load %arg2[%135, %c0_58] : memref<28x32xf32, #tpu.memory_space<vmem>>, vector<1x32xf32>
    %c20_i32_59 = arith.constant 20 : i32
    %137 = arith.addi %0, %c20_i32_59 : i32
    %c1_i32_60 = arith.constant 1 : i32
    %138 = arith.addi %137, %c1_i32_60 : i32
    %139 = arith.index_cast %138 : i32 to index
    %140 = memref.load %arg1[%139] : memref<32xi32, #tpu.memory_space<smem>>
    %141 = arith.index_cast %140 : i32 to index
    %c0_61 = arith.constant 0 : index
    %142 = vector.load %arg2[%141, %c0_61] : memref<28x32xf32, #tpu.memory_space<vmem>>, vector<1x32xf32>
    %c20_i32_62 = arith.constant 20 : i32
    %143 = arith.addi %0, %c20_i32_62 : i32
    %c2_i32_63 = arith.constant 2 : i32
    %144 = arith.addi %143, %c2_i32_63 : i32
    %145 = arith.index_cast %144 : i32 to index
    %146 = memref.load %arg1[%145] : memref<32xi32, #tpu.memory_space<smem>>
    %147 = arith.index_cast %146 : i32 to index
    %c0_64 = arith.constant 0 : index
    %148 = vector.load %arg2[%147, %c0_64] : memref<28x32xf32, #tpu.memory_space<vmem>>, vector<1x32xf32>
    %c20_i32_65 = arith.constant 20 : i32
    %149 = arith.addi %0, %c20_i32_65 : i32
    %c3_i32_66 = arith.constant 3 : i32
    %150 = arith.addi %149, %c3_i32_66 : i32
    %151 = arith.index_cast %150 : i32 to index
    %152 = memref.load %arg1[%151] : memref<32xi32, #tpu.memory_space<smem>>
    %153 = arith.index_cast %152 : i32 to index
    %c0_67 = arith.constant 0 : index
    %154 = vector.load %arg2[%153, %c0_67] : memref<28x32xf32, #tpu.memory_space<vmem>>, vector<1x32xf32>
    %155 = tpu.concatenate %136, %142, %148, %154 in 1 : vector<1x32xf32>, vector<1x32xf32>, vector<1x32xf32>, vector<1x32xf32> -> vector<1x128xf32>
    %c5 = arith.constant 5 : index
    %c0_68 = arith.constant 0 : index
    %156 = vector.load %arg3[%c5, %c0_68] : memref<8x128xf32, #tpu.memory_space<vmem>>, vector<1x128xf32>
    tpu.vector_store %arg3[%c5, %c0_68], %155 {strides = array<i32>} : memref<8x128xf32, #tpu.memory_space<vmem>>, vector<1x128xf32>,
    %c24_i32 = arith.constant 24 : i32
    %157 = arith.addi %0, %c24_i32 : i32
    %c0_i32_69 = arith.constant 0 : i32
    %158 = arith.addi %157, %c0_i32_69 : i32
    %159 = arith.index_cast %158 : i32 to index
    %160 = memref.load %arg1[%159] : memref<32xi32, #tpu.memory_space<smem>>
    %161 = arith.index_cast %160 : i32 to index
    %c0_70 = arith.constant 0 : index
    %162 = vector.load %arg2[%161, %c0_70] : memref<28x32xf32, #tpu.memory_space<vmem>>, vector<1x32xf32>
    %c24_i32_71 = arith.constant 24 : i32
    %163 = arith.addi %0, %c24_i32_71 : i32
    %c1_i32_72 = arith.constant 1 : i32
    %164 = arith.addi %163, %c1_i32_72 : i32
    %165 = arith.index_cast %164 : i32 to index
    %166 = memref.load %arg1[%165] : memref<32xi32, #tpu.memory_space<smem>>
    %167 = arith.index_cast %166 : i32 to index
    %c0_73 = arith.constant 0 : index
    %168 = vector.load %arg2[%167, %c0_73] : memref<28x32xf32, #tpu.memory_space<vmem>>, vector<1x32xf32>
    %c24_i32_74 = arith.constant 24 : i32
    %169 = arith.addi %0, %c24_i32_74 : i32
    %c2_i32_75 = arith.constant 2 : i32
    %170 = arith.addi %169, %c2_i32_75 : i32
    %171 = arith.index_cast %170 : i32 to index
    %172 = memref.load %arg1[%171] : memref<32xi32, #tpu.memory_space<smem>>
    %173 = arith.index_cast %172 : i32 to index
    %c0_76 = arith.constant 0 : index
    %174 = vector.load %arg2[%173, %c0_76] : memref<28x32xf32, #tpu.memory_space<vmem>>, vector<1x32xf32>
    %c24_i32_77 = arith.constant 24 : i32
    %175 = arith.addi %0, %c24_i32_77 : i32
    %c3_i32_78 = arith.constant 3 : i32
    %176 = arith.addi %175, %c3_i32_78 : i32
    %177 = arith.index_cast %176 : i32 to index
    %178 = memref.load %arg1[%177] : memref<32xi32, #tpu.memory_space<smem>>
    %179 = arith.index_cast %178 : i32 to index
    %c0_79 = arith.constant 0 : index
    %180 = vector.load %arg2[%179, %c0_79] : memref<28x32xf32, #tpu.memory_space<vmem>>, vector<1x32xf32>
    %181 = tpu.concatenate %162, %168, %174, %180 in 1 : vector<1x32xf32>, vector<1x32xf32>, vector<1x32xf32>, vector<1x32xf32> -> vector<1x128xf32>
    %c6 = arith.constant 6 : index
    %c0_80 = arith.constant 0 : index
    %182 = vector.load %arg3[%c6, %c0_80] : memref<8x128xf32, #tpu.memory_space<vmem>>, vector<1x128xf32>
    tpu.vector_store %arg3[%c6, %c0_80], %181 {strides = array<i32>} : memref<8x128xf32, #tpu.memory_space<vmem>>, vector<1x128xf32>,
    %c28_i32 = arith.constant 28 : i32
    %183 = arith.addi %0, %c28_i32 : i32
    %c0_i32_81 = arith.constant 0 : i32
    %184 = arith.addi %183, %c0_i32_81 : i32
    %185 = arith.index_cast %184 : i32 to index
    %186 = memref.load %arg1[%185] : memref<32xi32, #tpu.memory_space<smem>>
    %187 = arith.index_cast %186 : i32 to index
    %c0_82 = arith.constant 0 : index
    %188 = vector.load %arg2[%187, %c0_82] : memref<28x32xf32, #tpu.memory_space<vmem>>, vector<1x32xf32>
    %c28_i32_83 = arith.constant 28 : i32
    %189 = arith.addi %0, %c28_i32_83 : i32
    %c1_i32_84 = arith.constant 1 : i32
    %190 = arith.addi %189, %c1_i32_84 : i32
    %191 = arith.index_cast %190 : i32 to index
    %192 = memref.load %arg1[%191] : memref<32xi32, #tpu.memory_space<smem>>
    %193 = arith.index_cast %192 : i32 to index
    %c0_85 = arith.constant 0 : index
    %194 = vector.load %arg2[%193, %c0_85] : memref<28x32xf32, #tpu.memory_space<vmem>>, vector<1x32xf32>
    %c28_i32_86 = arith.constant 28 : i32
    %195 = arith.addi %0, %c28_i32_86 : i32
    %c2_i32_87 = arith.constant 2 : i32
    %196 = arith.addi %195, %c2_i32_87 : i32
    %197 = arith.index_cast %196 : i32 to index
    %198 = memref.load %arg1[%197] : memref<32xi32, #tpu.memory_space<smem>>
    %199 = arith.index_cast %198 : i32 to index
    %c0_88 = arith.constant 0 : index
    %200 = vector.load %arg2[%199, %c0_88] : memref<28x32xf32, #tpu.memory_space<vmem>>, vector<1x32xf32>
    %c28_i32_89 = arith.constant 28 : i32
    %201 = arith.addi %0, %c28_i32_89 : i32
    %c3_i32_90 = arith.constant 3 : i32
    %202 = arith.addi %201, %c3_i32_90 : i32
    %203 = arith.index_cast %202 : i32 to index
    %204 = memref.load %arg1[%203] : memref<32xi32, #tpu.memory_space<smem>>
    %205 = arith.index_cast %204 : i32 to index
    %c0_91 = arith.constant 0 : index
    %206 = vector.load %arg2[%205, %c0_91] : memref<28x32xf32, #tpu.memory_space<vmem>>, vector<1x32xf32>
    %207 = tpu.concatenate %188, %194, %200, %206 in 1 : vector<1x32xf32>, vector<1x32xf32>, vector<1x32xf32>, vector<1x32xf32> -> vector<1x128xf32>
    %c7 = arith.constant 7 : index
    %c0_92 = arith.constant 0 : index
    %208 = vector.load %arg3[%c7, %c0_92] : memref<8x128xf32, #tpu.memory_space<vmem>>, vector<1x128xf32>
    tpu.vector_store %arg3[%c7, %c0_92], %207 {strides = array<i32>} : memref<8x128xf32, #tpu.memory_space<vmem>>, vector<1x128xf32>,
    return
  }
  func.func @transform_0(%arg0: i32, %arg1: memref<32xi32, #tpu.memory_space<smem>>) -> (i32, i32) {
    %c0_i32 = arith.constant 0 : i32
    %c0_i32_0 = arith.constant 0 : i32
    %c0_i32_1 = arith.constant 0 : i32
    return %c0_i32, %c0_i32_0 : i32, i32
  }
  func.func @transform_1(%arg0: i32, %arg1: memref<32xi32, #tpu.memory_space<smem>>) -> (i32, i32) {
    %c0_i32 = arith.constant 0 : i32
    %c0_i32_0 = arith.constant 0 : i32
    return %arg0, %c0_i32 : i32, i32
  }
}

</mosaic_0001>

<llo_original>
// kernel: tpu_custom_call.1
$region0: #{tpu_custom_call.1}
  #allocation0 [shape = 'u32[]', space=smem, size = 0x4, offset = 0x4, fixed_abs, tag = 'smem constant byte address 0x4 - core index']
  #allocation1 [shape = 'u32[144,128]{1,0:T(1,128)}', space=vmem, size = 0x12000, scoped, tag = 'internal scratch']
  #allocation2 [shape = 's32[1]{0}', space=sflag, size = 0x4, scoped, tag = 'scoped memory for tpu_custom_call.1']
  #allocation3 [shape = 'u8[512]{0}', space=smem, size = 0x200, scoped, tag = 'prefetched SMEM operand 0']
  %s0 = inlined_call_operand.hbm [shape: s32[32], index: 0, kind: input, shape index: {}]
  %s1 = inlined_call_operand.hbm [shape: f32[28,32], index: 1, kind: input, shape index: {}]
  %s2 = inlined_call_operand.hbm [shape: f32[8,128], index: 2, kind: output, shape index: {}]
  %s3 = sld [smem:[#allocation0]]
  $region18: #{tpu_custom_call.1} parent=0
    _
  %s5 = ssub.s32 1, %s3
  %s6 = scalar_select 0, %s5, %s3
  %8 = dma.hbm_to_smem %s0, 16, [#allocation3], [#allocation2]
  %9 = dma.done [#allocation2], 16
  %10 = sfence
  $region1: #{tpu_custom_call.1} parent=0
    #allocation4 [shape = 'u8[16384]{0}', space=vmem, size = 0x4000, scoped, tag = 'input window, operand 1, single buffered']
    #allocation5 [shape = 's32[1]{0}', space=sflag, size = 0x4, scoped, tag = 'scoped memory for tpu_custom_call.1']
    #allocation6 [shape = 's32[1]{0}', space=sflag, size = 0x4, scoped, tag = 'scoped memory for tpu_custom_call.1']
    #allocation7 [shape = 'u8[4096]{0}', space=vmem, size = 0x1000, scoped, tag = 'output window, operand 0, single buffered']
    %11 = vsyncpa [#allocation5], 0
    %12 = vsyncpa [#allocation6], 0
    // Predicated region
    $region2: #{tpu_custom_call.1} parent=1 // pred_check
      _
    $region3: #{tpu_custom_call.1} parent=1 // pred_check_branch
      %14 = sbr.rel (0) target = $region5
    $region4: #{tpu_custom_call.1} parent=1 // pred_region
      %s16 = ssub.s32 512, 512
      %17 = vsyncadd [#allocation5], %s16
      %s18 = sshll.u32 [#allocation4], 4
      %s19 = int_to_ptr.vmem [resolvable:$true] %s18
      %24 = dma.hbm_to_vmem [thread:$0]  %s1, 512, %s19, [#allocation5], 128, 128, 8
    $region5: #{tpu_custom_call.1} parent=1 // pred_fallthru
      _
    // Predicated region
    $region6: #{tpu_custom_call.1} parent=1 // pred_check
      _
    $region7: #{tpu_custom_call.1} parent=1 // pred_check_branch
      %26 = sbr.rel (0) target = $region9
    $region8: #{tpu_custom_call.1} parent=1 // pred_region
      %27 = dma.done [#allocation5], 512
    $region9: #{tpu_custom_call.1} parent=1 // pred_fallthru
      _
    %s28 = smul.u32 0, 32
    %s29 = sld [smem:[#allocation3 + %s28]]
    %s30 = scalar_lea.vmem [#allocation4], %s29
    %v31 = vld [vmem:[%s30] sm:$0x1]
    %s32 = sadd.s32 %s28, 1
    %s33 = sld [smem:[#allocation3 + %s32]]
    %s34 = scalar_lea.vmem [#allocation4], %s33
    %v35 = vld [vmem:[%s34] sm:$0x1]
    %s36 = sadd.s32 %s28, 2
    %s37 = sld [smem:[#allocation3 + %s36]]
    %s38 = scalar_lea.vmem [#allocation4], %s37
    %v39 = vld [vmem:[%s38] sm:$0x1]
    %s40 = sadd.s32 %s28, 3
    %s41 = sld [smem:[#allocation3 + %s40]]
    %s42 = scalar_lea.vmem [#allocation4], %s41
    %v43 = vld [vmem:[%s42] sm:$0x1]
    %45 = vrot.lane.b32.xlu0 %v35, 32
    %v46 = vpop.permute.xlu0 %45
    %49 = vrot.lane.b32.xlu0 %v39, 64
    %v50 = vpop.permute.xlu0 %49
    %53 = vrot.lane.b32.xlu0 %v43, 96
    %v54 = vpop.permute.xlu0 %53
    %vm56 = vcmask 261120
    %v57 = vsel %vm56, %v31, %v46
    %vm58 = vcmask 523264
    %v59 = vsel %vm58, %v57, %v50
    %vm60 = vcmask 785408
    %v61 = vsel %vm60, %v59, %v54
    %62 = vst [vmem:[#allocation7] sm:$0x1] %v61
    %s63 = sadd.s32 %s28, 4
    %s64 = sld [smem:[#allocation3 + %s63]]
    %s65 = scalar_lea.vmem [#allocation4], %s64
    %v66 = vld [vmem:[%s65] sm:$0x1]
    %s67 = sadd.s32 %s28, 5
    %s68 = sld [smem:[#allocation3 + %s67]]
    %s69 = scalar_lea.vmem [#allocation4], %s68
    %v70 = vld [vmem:[%s69] sm:$0x1]
    %s71 = sadd.s32 %s28, 6
    %s72 = sld [smem:[#allocation3 + %s71]]
    %s73 = scalar_lea.vmem [#allocation4], %s72
    %v74 = vld [vmem:[%s73] sm:$0x1]
    %s75 = sadd.s32 %s28, 7
    %s76 = sld [smem:[#allocation3 + %s75]]
    %s77 = scalar_lea.vmem [#allocation4], %s76
    %v78 = vld [vmem:[%s77] sm:$0x1]
    %80 = vrot.lane.b32.xlu0 %v70, 32
    %v81 = vpop.permute.xlu0 %80
    %84 = vrot.lane.b32.xlu0 %v74, 64
    %v85 = vpop.permute.xlu0 %84
    %88 = vrot.lane.b32.xlu0 %v78, 96
    %v89 = vpop.permute.xlu0 %88
    %v91 = vsel %vm56, %v66, %v81
    %v92 = vsel %vm58, %v91, %v85
    %v93 = vsel %vm60, %v92, %v89
    %94 = vst [vmem:[#allocation7 + $0x1] sm:$0x1] %v93
    %s95 = sadd.s32 %s28, 8
    %s96 = sld [smem:[#allocation3 + %s95]]
    %s97 = scalar_lea.vmem [#allocation4], %s96
    %v98 = vld [vmem:[%s97] sm:$0x1]
    %s99 = sadd.s32 %s28, 9
    %s100 = sld [smem:[#allocation3 + %s99]]
    %s101 = scalar_lea.vmem [#allocation4], %s100
    %v102 = vld [vmem:[%s101] sm:$0x1]
    %s103 = sadd.s32 %s28, 10
    %s104 = sld [smem:[#allocation3 + %s103]]
    %s105 = scalar_lea.vmem [#allocation4], %s104
    %v106 = vld [vmem:[%s105] sm:$0x1]
    %s107 = sadd.s32 %s28, 11
    %s108 = sld [smem:[#allocation3 + %s107]]
    %s109 = scalar_lea.vmem [#allocation4], %s108
    %v110 = vld [vmem:[%s109] sm:$0x1]
    %112 = vrot.lane.b32.xlu0 %v102, 32
    %v113 = vpop.permute.xlu0 %112
    %116 = vrot.lane.b32.xlu0 %v106, 64
    %v117 = vpop.permute.xlu0 %116
    %120 = vrot.lane.b32.xlu0 %v110, 96
    %v121 = vpop.permute.xlu0 %120
    %v123 = vsel %vm56, %v98, %v113
    %v124 = vsel %vm58, %v123, %v117
    %v125 = vsel %vm60, %v124, %v121
    %126 = vst [vmem:[#allocation7 + $0x2] sm:$0x1] %v125
    %s127 = sadd.s32 %s28, 12
    %s128 = sld [smem:[#allocation3 + %s127]]
    %s129 = scalar_lea.vmem [#allocation4], %s128
    %v130 = vld [vmem:[%s129] sm:$0x1]
    %s131 = sadd.s32 %s28, 13
    %s132 = sld [smem:[#allocation3 + %s131]]
    %s133 = scalar_lea.vmem [#allocation4], %s132
    %v134 = vld [vmem:[%s133] sm:$0x1]
    %s135 = sadd.s32 %s28, 14
    %s136 = sld [smem:[#allocation3 + %s135]]
    %s137 = scalar_lea.vmem [#allocation4], %s136
    %v138 = vld [vmem:[%s137] sm:$0x1]
    %s139 = sadd.s32 %s28, 15
    %s140 = sld [smem:[#allocation3 + %s139]]
    %s141 = scalar_lea.vmem [#allocation4], %s140
    %v142 = vld [vmem:[%s141] sm:$0x1]
    %144 = vrot.lane.b32.xlu0 %v134, 32
    %v145 = vpop.permute.xlu0 %144
    %148 = vrot.lane.b32.xlu0 %v138, 64
    %v149 = vpop.permute.xlu0 %148
    %152 = vrot.lane.b32.xlu0 %v142, 96
    %v153 = vpop.permute.xlu0 %152
    %v155 = vsel %vm56, %v130, %v145
    %v156 = vsel %vm58, %v155, %v149
    %v157 = vsel %vm60, %v156, %v153
    %158 = vst [vmem:[#allocation7 + $0x3] sm:$0x1] %v157
    %s159 = sadd.s32 %s28, 16
    %s160 = sld [smem:[#allocation3 + %s159]]
    %s161 = scalar_lea.vmem [#allocation4], %s160
    %v162 = vld [vmem:[%s161] sm:$0x1]
    %s163 = sadd.s32 %s28, 17
    %s164 = sld [smem:[#allocation3 + %s163]]
    %s165 = scalar_lea.vmem [#allocation4], %s164
    %v166 = vld [vmem:[%s165] sm:$0x1]
    %s167 = sadd.s32 %s28, 18
    %s168 = sld [smem:[#allocation3 + %s167]]
    %s169 = scalar_lea.vmem [#allocation4], %s168
    %v170 = vld [vmem:[%s169] sm:$0x1]
    %s171 = sadd.s32 %s28, 19
    %s172 = sld [smem:[#allocation3 + %s171]]
    %s173 = scalar_lea.vmem [#allocation4], %s172
    %v174 = vld [vmem:[%s173] sm:$0x1]
    %176 = vrot.lane.b32.xlu0 %v166, 32
    %v177 = vpop.permute.xlu0 %176
    %180 = vrot.lane.b32.xlu0 %v170, 64
    %v181 = vpop.permute.xlu0 %180
    %184 = vrot.lane.b32.xlu0 %v174, 96
    %v185 = vpop.permute.xlu0 %184
    %v187 = vsel %vm56, %v162, %v177
    %v188 = vsel %vm58, %v187, %v181
    %v189 = vsel %vm60, %v188, %v185
    %190 = vst [vmem:[#allocation7 + $0x4] sm:$0x1] %v189
    %s191 = sadd.s32 %s28, 20
    %s192 = sld [smem:[#allocation3 + %s191]]
    %s193 = scalar_lea.vmem [#allocation4], %s192
    %v194 = vld [vmem:[%s193] sm:$0x1]
    %s195 = sadd.s32 %s28, 21
    %s196 = sld [smem:[#allocation3 + %s195]]
    %s197 = scalar_lea.vmem [#allocation4], %s196
    %v198 = vld [vmem:[%s197] sm:$0x1]
    %s199 = sadd.s32 %s28, 22
    %s200 = sld [smem:[#allocation3 + %s199]]
    %s201 = scalar_lea.vmem [#allocation4], %s200
    %v202 = vld [vmem:[%s201] sm:$0x1]
    %s203 = sadd.s32 %s28, 23
    %s204 = sld [smem:[#allocation3 + %s203]]
    %s205 = scalar_lea.vmem [#allocation4], %s204
    %v206 = vld [vmem:[%s205] sm:$0x1]
    %208 = vrot.lane.b32.xlu0 %v198, 32
    %v209 = vpop.permute.xlu0 %208
    %212 = vrot.lane.b32.xlu0 %v202, 64
    %v213 = vpop.permute.xlu0 %212
    %216 = vrot.lane.b32.xlu0 %v206, 96
    %v217 = vpop.permute.xlu0 %216
    %v219 = vsel %vm56, %v194, %v209
    %v220 = vsel %vm58, %v219, %v213
    %v221 = vsel %vm60, %v220, %v217
    %222 = vst [vmem:[#allocation7 + $0x5] sm:$0x1] %v221
    %s223 = sadd.s32 %s28, 24
    %s224 = sld [smem:[#allocation3 + %s223]]
    %s225 = scalar_lea.vmem [#allocation4], %s224
    %v226 = vld [vmem:[%s225] sm:$0x1]
    %s227 = sadd.s32 %s28, 25
    %s228 = sld [smem:[#allocation3 + %s227]]
    %s229 = scalar_lea.vmem [#allocation4], %s228
    %v230 = vld [vmem:[%s229] sm:$0x1]
    %s231 = sadd.s32 %s28, 26
    %s232 = sld [smem:[#allocation3 + %s231]]
    %s233 = scalar_lea.vmem [#allocation4], %s232
    %v234 = vld [vmem:[%s233] sm:$0x1]
    %s235 = sadd.s32 %s28, 27
    %s236 = sld [smem:[#allocation3 + %s235]]
    %s237 = scalar_lea.vmem [#allocation4], %s236
    %v238 = vld [vmem:[%s237] sm:$0x1]
    %240 = vrot.lane.b32.xlu0 %v230, 32
    %v241 = vpop.permute.xlu0 %240
    %244 = vrot.lane.b32.xlu0 %v234, 64
    %v245 = vpop.permute.xlu0 %244
    %248 = vrot.lane.b32.xlu0 %v238, 96
    %v249 = vpop.permute.xlu0 %248
    %v251 = vsel %vm56, %v226, %v241
    %v252 = vsel %vm58, %v251, %v245
    %v253 = vsel %vm60, %v252, %v249
    %254 = vst [vmem:[#allocation7 + $0x6] sm:$0x1] %v253
    %s255 = sadd.s32 %s28, 28
    %s256 = sld [smem:[#allocation3 + %s255]]
    %s257 = scalar_lea.vmem [#allocation4], %s256
    %v258 = vld [vmem:[%s257] sm:$0x1]
    %s259 = sadd.s32 %s28, 29
    %s260 = sld [smem:[#allocation3 + %s259]]
    %s261 = scalar_lea.vmem [#allocation4], %s260
    %v262 = vld [vmem:[%s261] sm:$0x1]
    %s263 = sadd.s32 %s28, 30
    %s264 = sld [smem:[#allocation3 + %s263]]
    %s265 = scalar_lea.vmem [#allocation4], %s264
    %v266 = vld [vmem:[%s265] sm:$0x1]
    %s267 = sadd.s32 %s28, 31
    %s268 = sld [smem:[#allocation3 + %s267]]
    %s269 = scalar_lea.vmem [#allocation4], %s268
    %v270 = vld [vmem:[%s269] sm:$0x1]
    %272 = vrot.lane.b32.xlu0 %v262, 32
    %v273 = vpop.permute.xlu0 %272
    %276 = vrot.lane.b32.xlu0 %v266, 64
    %v277 = vpop.permute.xlu0 %276
    %280 = vrot.lane.b32.xlu0 %v270, 96
    %v281 = vpop.permute.xlu0 %280
    %v283 = vsel %vm56, %v258, %v273
    %v284 = vsel %vm58, %v283, %v277
    %v285 = vsel %vm60, %v284, %v281
    %286 = vst [vmem:[#allocation7 + $0x7] sm:$0x1] %v285
    // Predicated region
    $region10: #{tpu_custom_call.1} parent=1 // pred_check
      _
    $region11: #{tpu_custom_call.1} parent=1 // pred_check_branch
      %288 = sbr.rel (0) target = $region13
    $region12: #{tpu_custom_call.1} parent=1 // pred_region
      %s290 = ssub.s32 128, 128
      %291 = vsyncadd [#allocation6], %s290
      %s293 = sshll.u32 [#allocation7], 4
      %s294 = int_to_ptr.vmem [resolvable:$true] %s293
      %296 = dma.vmem_to_hbm [thread:$0]  %s294, 128, %s2, [#allocation6]
    $region13: #{tpu_custom_call.1} parent=1 // pred_fallthru
      _
    // Predicated region
    $region14: #{tpu_custom_call.1} parent=1 // pred_check
      _
    $region15: #{tpu_custom_call.1} parent=1 // pred_check_branch
      %298 = sbr.rel (0) target = $region17
    $region16: #{tpu_custom_call.1} parent=1 // pred_region
      %299 = dma.done [#allocation6], 128
    $region17: #{tpu_custom_call.1} parent=1 // pred_fallthru
      _
    %300 = vsyncpa [#allocation5], 1
    %301 = vsyncpa [#allocation6], 1

</llo_original>
